<compile_context>
chip_gen: v5e
topology: v5e:2x2
jax: 0.10.0
libtpu: 0.0.40
codegen_flags: <defaults>
</compile_context>

<pallas_src>
import functools

import numpy as np
import jax
import jax.numpy as jnp
from jax import lax
from jax.experimental import pallas as pl
from jax.experimental.pallas import tpu as pltpu


def _round_up(x, m):
    return (x + m - 1) // m * m


def _cdiv(a, b):
    return (a + b - 1) // b


def _pred_from_scores(co, K):
    """argmax over K with first-max tie break (matches torch.max), shape (TN, 1)."""
    TN = co.shape[0]
    colk = lax.broadcasted_iota(jnp.int32, (TN, K), 1)
    row_max = jnp.max(co, axis=-1, keepdims=True)
    return jnp.min(jnp.where(co == row_max, colk, K), axis=-1, keepdims=True)


def _stats_kernel(emb_ref, co_ref, lm_ref, sum_ref, cnt_ref, *, C):
    """Pass A: per-(cluster,class) TRAIN embedding sums (KC,D) and counts (1,KC)."""
    t = pl.program_id(1)

    @pl.when(t == 0)
    def _init():
        sum_ref[...] = jnp.zeros_like(sum_ref)
        cnt_ref[...] = jnp.zeros_like(cnt_ref)

    TN, _ = emb_ref.shape
    K = co_ref.shape[-1]
    KC = sum_ref.shape[0]

    emb = emb_ref[...].astype(jnp.bfloat16)          # bf16 operand for the MXU
    co = co_ref[...].astype(jnp.float32)
    lm = lm_ref[...]                                  # (TN,1) packed: label | (train<<16)
    lbl = jnp.bitwise_and(lm, 0xFFFF)
    train = lm >> 16

    pred = _pred_from_scores(co, K)                   # (TN,1)
    mlbl = jnp.where(train > 0, lbl, C)               # non-train -> dummy class C
    r_col = lax.broadcasted_iota(jnp.int32, (TN, KC), 1)
    combined = pred * C + mlbl
    # joint[n, k*C+c] = 1 iff sample n is TRAIN, pred==k and label==c
    joint = jnp.logical_and(combined == r_col, mlbl < C).astype(jnp.bfloat16)   # (TN,KC)

    # fused MXU contraction over the sample axis (bf16 x bf16 -> f32 accumulate)
    sum_ref[...] += lax.dot_general(joint, emb, (((0,), (0,)), ((), ())),
                                    preferred_element_type=jnp.float32)         # (KC,D)
    # exact counts: 0/1 bf16 values reduced with an f32 accumulator (VPU/XLU, cheap)
    cnt_ref[...] += jnp.sum(joint, axis=0, keepdims=True, dtype=jnp.float32)    # (1,KC)


def _softmax_kernel(emb_ref, co_ref, lm_ref, anch_ref, asq_ref,
                    m_ref, l_ref, c_ref, *, C, inv_sigma, exp_bf16):
    """Pass B: online softmax of -||e-anchor||^2/sigma over NON-train samples per (k,c)."""
    t = pl.program_id(1)
    NEG = jnp.float32(-1e30)

    @pl.when(t == 0)
    def _init():
        m_ref[...] = jnp.full_like(m_ref, NEG)
        l_ref[...] = jnp.zeros_like(l_ref)
        c_ref[...] = jnp.zeros_like(c_ref)

    TN, _ = emb_ref.shape
    K = co_ref.shape[-1]
    KC = anch_ref.shape[0]

    emb = emb_ref[...].astype(jnp.bfloat16)
    co = co_ref[...].astype(jnp.float32)
    lm = lm_ref[...]
    nontrain = (lm >> 16) == 0

    pred = _pred_from_scores(co, K)                                             # (TN,1)
    esq = jnp.sum(jnp.square(emb.astype(jnp.float32)), axis=-1, keepdims=True)  # (TN,1)
    # anch_ref holds (2/sigma)*anchor (bf16); asq_ref holds ||anchor||^2/sigma (f32, per-column
    # constant, so its rounding cancels exactly in the softmax).
    cross = lax.dot_general(emb, anch_ref[...], (((1,), (1,)), ((), ())),
                            preferred_element_type=jnp.float32)                 # (TN,KC)
    scores = cross - esq * inv_sigma - asq_ref[...]                             # -||e-a||^2/sigma

    r_col = lax.broadcasted_iota(jnp.int32, (TN, KC), 1)
    lo = pred * C
    valid = jnp.logical_and(jnp.logical_and(r_col >= lo, r_col < lo + C), nontrain)

    m_prev = m_ref[...]
    tile_max = jnp.max(jnp.where(valid, scores, NEG), axis=0, keepdims=True)    # (1,KC)
    new_m = jnp.maximum(m_prev, tile_max)

    x = scores - new_m
    if exp_bf16:      # v6e/v7x: EUP is the binding slot of this pass; bf16 roughly halves it
        x = x.astype(jnp.bfloat16)
    # NOTE: exp() runs on UNMASKED scores (can overflow to +inf); the where is a select
    # against a literal 0 so the inf never propagates (all-invalid columns stay at l==0).
    p = jnp.where(valid, jnp.exp(x), 0.0).astype(jnp.bfloat16)                  # (TN,KC)

    alpha = jnp.exp(m_prev - new_m)                                             # (1,KC)
    l_ref[...] = alpha * l_ref[...] + jnp.sum(p, axis=0, keepdims=True,
                                              dtype=jnp.float32)
    c_ref[...] = alpha * c_ref[...] + lax.dot_general(
        emb, p, (((0,), (0,)), ((), ())), preferred_element_type=jnp.float32)   # (D,KC)
    m_ref[...] = new_m


def cluster_assignment_loss(sample2cluster_out, embedding, label, train_mask, *,
                            num_classes, sigma=1.0, beta=0.5,
                            block_n=None, core_splits=None, exp_bf16=None):
    """Pallas TPU implementation of ClusterAssignmentLoss.forward. Returns a scalar."""
    if num_classes is None:
        raise ValueError("num_classes must be given statically (torch derives it from "
                         "max(label)+1 at runtime, which would force a host sync here).")

    kind = ""
    try:
        kind = jax.devices()[0].device_kind.lower()
    except Exception:
        pass
    is_v7 = ("v7" in kind) or ("7x" in kind)
    if block_n is None:
        block_n = 256 if is_v7 else 512              # v7x: only 64 MiB VMEM/TC
    if exp_bf16 is None:
        exp_bf16 = not ("v5 lite" in kind or "v5e" in kind or "v5lite" in kind)
    if core_splits is None:
        core_splits = 2 if (is_v7 or "v4" in kind or "v5p" in kind) else 1

    s2c = jnp.asarray(sample2cluster_out)
    emb = jnp.asarray(embedding)
    lbl = jnp.asarray(label, dtype=jnp.int32)
    msk = jnp.asarray(train_mask).astype(jnp.int32)

    N, K = s2c.shape
    D = emb.shape[-1]
    C = int(num_classes)
    KC = K * C
    P = max(1, int(core_splits))

    TN = max(16, min(_round_up(int(block_n), 16), _round_up(N, 16)))
    nt_per = max(1, _cdiv(_cdiv(N, TN), P))
    Np = P * nt_per * TN
    pad = Np - N

    # single packed int32 side stream: label | (train<<16); padded rows are inert
    # (dummy class C + train bit set -> excluded from every statistic).
    lm = jnp.bitwise_or(lbl, msk << 16)
    if pad:
        emb = jnp.pad(emb, ((0, pad), (0, 0)))
        s2c = jnp.pad(s2c, ((0, pad), (0, 0)))
        lm = jnp.pad(lm, (0, pad), constant_values=C | (1 << 16))
    lm2 = lm.reshape(Np, 1)

    eb = jnp.dtype(emb.dtype).itemsize
    cb = jnp.dtype(s2c.dtype).itemsize
    tile_bytes = TN * (D * eb + K * cb + 512)        # emb + s2c + lane-padded lm tile
    interm_bytes = 4 * TN * KC * 4                   # (TN,KC) f32 temporaries
    vmem_cap = (56 if is_v7 else 110) * 2 ** 20

    def _vmem(resident_bytes):
        need = 4 * tile_bytes + interm_bytes + resident_bytes + 8 * 2 ** 20
        return int(min(vmem_cap, max(32 * 2 ** 20, need)))

    in_specs = [
        pl.BlockSpec((TN, D), lambda c, t: (c * nt_per + t, 0)),
        pl.BlockSpec((TN, K), lambda c, t: (c * nt_per + t, 0)),
        pl.BlockSpec((TN, 1), lambda c, t: (c * nt_per + t, 0)),
    ]
    grid = (P, nt_per)
    dimsem = ("parallel", "arbitrary")               # core axis parallel, N-tiles carry state

    # ------------------- pass A: per-(cluster,class) train sums / counts ------------------
    sum_p, cnt_p = pl.pallas_call(
        functools.partial(_stats_kernel, C=C),
        out_shape=(jax.ShapeDtypeStruct((P, KC, D), jnp.float32),
                   jax.ShapeDtypeStruct((P, 1, KC), jnp.float32)),
        grid_spec=pltpu.PrefetchScalarGridSpec(
            num_scalar_prefetch=0, grid=grid, in_specs=in_specs,
            out_specs=(pl.BlockSpec((None, KC, D), lambda c, t: (c, 0, 0)),
                       pl.BlockSpec((None, 1, KC), lambda c, t: (c, 0, 0)))),
        compiler_params=pltpu.CompilerParams(
            dimension_semantics=dimsem,
            vmem_limit_bytes=_vmem(KC * D * 4 + KC * 4)),
        cost_estimate=pl.CostEstimate(
            flops=int(2 * Np * KC * D + 6 * Np * KC),
            transcendentals=0,
            bytes_accessed=int(Np * (D * eb + K * cb + 4) + P * (KC * D + KC) * 4)),
    )(emb, s2c, lm2)

    # ------------- anchors / per-class prep in plain JAX (tiny, O(K*C*D)) -----------------
    sum_tot = jnp.sum(sum_p, axis=0)                                    # (KC, D)
    cnt_tot = jnp.sum(cnt_p, axis=0).reshape(KC)                        # (KC,)
    anchors = sum_tot / jnp.maximum(cnt_tot, 1.0)[:, None]              # clamp(min=1), f32
    anch_scaled = ((2.0 / float(sigma)) * anchors).astype(jnp.bfloat16)  # (KC, D) bf16
    asq_row = (jnp.sum(anchors * anchors, axis=-1) / float(sigma)
               ).reshape(1, KC).astype(jnp.float32)                      # (1, KC) f32

    # ----------------- pass B: online softmax over non-train samples ----------------------
    m_p, l_p, c_p = pl.pallas_call(
        functools.partial(_softmax_kernel, C=C, inv_sigma=float(1.0 / sigma),
                          exp_bf16=bool(exp_bf16)),
        out_shape=(jax.ShapeDtypeStruct((P, 1, KC), jnp.float32),
                   jax.ShapeDtypeStruct((P, 1, KC), jnp.float32),
                   jax.ShapeDtypeStruct((P, D, KC), jnp.float32)),
        grid_spec=pltpu.PrefetchScalarGridSpec(
            num_scalar_prefetch=0, grid=grid,
            in_specs=in_specs + [
                pl.BlockSpec((KC, D), lambda c, t: (0, 0)),     # resident scaled anchors
                pl.BlockSpec((1, KC), lambda c, t: (0, 0)),     # resident ||anchor||^2/sigma
            ],
            out_specs=(pl.BlockSpec((None, 1, KC), lambda c, t: (c, 0, 0)),
                       pl.BlockSpec((None, 1, KC), lambda c, t: (c, 0, 0)),
                       pl.BlockSpec((None, D, KC), lambda c, t: (c, 0, 0)))),
        compiler_params=pltpu.CompilerParams(
            dimension_semantics=dimsem,
            vmem_limit_bytes=_vmem(KC * D * (2 + 4) + 4 * KC * 4)),
        cost_estimate=pl.CostEstimate(
            flops=int(4 * Np * KC * D + 10 * Np * KC),
            transcendentals=int(Np * KC),
            bytes_accessed=int(Np * (D * eb + K * cb + 4) + KC * D * 2
                               + P * (KC * D + 2 * KC) * 4)),
    )(emb, s2c, lm2, anch_scaled, asq_row)

    # --------------------- finalize in plain JAX (all O(K*C*D)) ---------------------------
    m_p = m_p.reshape(P, KC)
    l_p = l_p.reshape(P, KC)
    m = jnp.max(m_p, axis=0)                                            # (KC,)
    scale = jnp.exp(m_p - m[None, :])                                   # (P,KC) flash combine
    l = jnp.sum(scale * l_p, axis=0)                                    # (KC,)
    cw = jnp.sum(scale[:, None, :] * c_p, axis=0)                       # (D,KC)
    cc = jnp.where(l[None, :] > 0.0, cw / jnp.maximum(l[None, :], 1e-30), 0.0)
    cc = cc.T.reshape(K, C, D)                                          # softmax cluster centers

    comp = cnt_tot.reshape(K, C)                                        # cluster_composition[:, :-1]
    class_cnt = jnp.sum(comp, axis=0)                                   # (C,)
    class_sum = jnp.sum(sum_tot.reshape(K, C, D), axis=0)               # (C,D)
    sup_center = class_sum / class_cnt[:, None]                         # unclamped (matches torch)

    known = jnp.sum(comp, axis=-1) > 0.0                                # (K,)
    n_known = jnp.maximum(jnp.sum(known.astype(jnp.float32)), 1.0)
    w = comp / jnp.maximum(jnp.sum(comp, axis=-1, keepdims=True), 1e-12)  # F.normalize(p=1)

    l2 = (jnp.sum(cc * cc, axis=-1) + jnp.sum(sup_center * sup_center, axis=-1)[None, :]
          - 2.0 * jnp.sum(cc * sup_center[None, :, :], axis=-1))        # (K,C) expanded form
    loss = jnp.sum(jnp.where(known[:, None], w * l2, 0.0)) / n_known

    gram = jnp.einsum('kcd,ked->kce', cc, cc)                           # (K,C,C)
    offdiag = 1.0 - jnp.eye(C, dtype=jnp.float32)
    dr = jnp.sum(jnp.where(known[:, None, None], jnp.square(gram) * offdiag[None], 0.0))
    dist_reg = dr / jnp.maximum(n_known * C * (C - 1), 1.0)

    return loss + beta * dist_reg


def _cluster_assignment_loss_ref(s2c, emb, label, train_mask, sigma=1.0, beta=0.5):
    """NumPy transliteration of the PyTorch forward (eager, dynamic shapes allowed)."""
    s2c = np.asarray(s2c, np.float32)
    emb = np.asarray(emb, np.float32)
    label = np.asarray(label).copy()
    tm = np.asarray(train_mask, bool)
    K = s2c.shape[-1]

    pred = np.argmax(s2c, -1)
    pred_oh = np.eye(K, dtype=np.float32)[pred]
    C = int(label.max()) + 1
    label[~tm] = C
    tl_oh = np.eye(C + 1, dtype=np.float32)[label]
    comp = pred_oh.T @ tl_oh
    has_known = np.arange(K)[comp[:, :-1].sum(-1) > 0]

    train_emb = emb[tm]
    sup_center = (train_emb.T @ tl_oh[tm][:, :-1] / tl_oh[tm][:, :-1].sum(0)).T   # (C, D)

    inner = []
    for k in has_known:
        m = (pred == k) & tm
        ce, cl = emb[m], tl_oh[m][:, :-1]
        inner.append((cl.T @ ce / np.clip(cl.T.sum(-1, keepdims=True), 1, None))[None])
    inner = np.vstack(inner)                                                      # (Kk, C, D)

    cc_list = []
    for i, k in enumerate(has_known):
        ce = emb[(pred == k) & ~tm]
        anchors = inner[i]
        if ce.shape[0] > 0:
            dm = (-(ce * ce).sum(-1, keepdims=True) - (anchors * anchors).sum(-1)
                  + 2 * ce @ anchors.T) / sigma
            e = np.exp(dm - dm.max(0, keepdims=True))
            w = e / e.sum(0, keepdims=True)
            cc_list.append((w.T @ ce)[None])
        else:
            cc_list.append(np.zeros((1, anchors.shape[0], emb.shape[1]), np.float32))
    cluster_centers = np.vstack(cc_list)                                          # (Kk, C, D)

    l2 = ((cluster_centers ** 2).sum(-1) + (sup_center ** 2).sum(-1)
          - 2 * (cluster_centers * sup_center).sum(-1))                           # (Kk, C)
    kcomp = comp[has_known][:, :-1]
    kcomp = kcomp / np.maximum(np.abs(kcomp).sum(-1, keepdims=True), 1e-12)
    loss = (l2 * kcomp).sum(-1).mean()

    gram = np.einsum('kcd,ked->kce', cluster_centers, cluster_centers)
    offdiag = ~np.eye(gram.shape[-1], dtype=bool)
    dist_reg = (gram[:, offdiag] ** 2).mean()
    return np.float32(loss + beta * dist_reg)


if __name__ == "__main__":
    key = jax.random.PRNGKey(0)
    k1, k2, k3, k4 = jax.random.split(key, 4)
    N, D, K, C = 96, 32, 8, 4
    embedding = jax.random.normal(k1, (N, D), dtype=jnp.float32)
    sample2cluster_out = jax.random.normal(k2, (N, K), dtype=jnp.float32)
    label = jax.random.randint(k3, (N,), 0, C)
    train_mask = jax.random.bernoulli(k4, 0.5, (N,))
    # guarantee every class has >=1 training sample (torch divides by per-class train counts
    # without clamping, so this keeps both implementations finite)
    label = label.at[:C].set(jnp.arange(C))
    train_mask = train_mask.at[:C].set(True)

    ref = _cluster_assignment_loss_ref(np.asarray(sample2cluster_out), np.asarray(embedding),
                                       np.asarray(label), np.asarray(train_mask),
                                       sigma=1.0, beta=0.5)

    # Run 1: f32 exp, small tiles (exercises multi-tile streaming / online-softmax carry).
    # Tolerance reflects the bf16 MXU path (f32 accumulation).
    out_a = cluster_assignment_loss(sample2cluster_out, embedding, label, train_mask,
                                    num_classes=C, sigma=1.0, beta=0.5,
                                    block_n=32, exp_bf16=False)
    out_a = float(jax.block_until_ready(out_a))
    assert np.isfinite(out_a), out_a
    np.testing.assert_allclose(out_a, float(ref), rtol=5e-2, atol=5e-2)

    # Run 2: hardware-default path (bf16 exp on v6e/v7x, 2-core split on v4/v5p/v7x,
    # generation-tuned block size); looser tolerance for the bf16-exp softmax weights.
    out_b = cluster_assignment_loss(sample2cluster_out, embedding, label, train_mask,
                                    num_classes=C, sigma=1.0, beta=0.5)
    out_b = float(jax.block_until_ready(out_b))
    assert np.isfinite(out_b), out_b
    np.testing.assert_allclose(out_b, float(ref), rtol=1.5e-1, atol=1.5e-1)

    print("KERNEL_OK")
</pallas_src>

<mosaic_0001>
module attributes {stable_mosaic.version = 11 : i64} {
  func.func @_stats_kernel(%arg0: i32, %arg1: i32, %arg2: memref<32x32xf32, #tpu.memory_space<vmem>>, %arg3: memref<32x8xf32, #tpu.memory_space<vmem>>, %arg4: memref<32x1xi32, #tpu.memory_space<vmem>>, %arg5: memref<1x32x32xf32, #tpu.memory_space<vmem>>, %arg6: memref<1x1x32xf32, #tpu.memory_space<vmem>>) attributes {dimension_semantics = [#tpu.dimension_semantics<parallel>, #tpu.dimension_semantics<arbitrary>], iteration_bounds = array<i64: 1, 3>, scalar_prefetch = 0 : i64, scratch_operands = 0 : i64, tpu.core_type = #tpu.core_type<tc>, window_params = [{transform_indices = @transform_0, window_bounds = array<i64: 32, 32>}, {transform_indices = @transform_1, window_bounds = array<i64: 32, 8>}, {transform_indices = @transform_2, window_bounds = array<i64: 32, 1>}, {transform_indices = @transform_3, window_bounds = array<i64: 1, 32, 32>}, {transform_indices = @transform_4, window_bounds = array<i64: 1, 1, 32>}]} {
    %c0_i32 = arith.constant 0 : i32
    %0 = arith.cmpi eq, %arg1, %c0_i32 : i32
    %1 = arith.extui %0 : i1 to i32
    %c0_i32_0 = arith.constant 0 : i32
    %2 = arith.cmpi ne, %1, %c0_i32_0 : i32
    scf.if %2 {
      %cst_24 = arith.constant 0.000000e+00 : f32
      %53 = vector.broadcast %cst_24 : f32 to vector<32x32xf32>
      %c0_25 = arith.constant 0 : index
      %c0_26 = arith.constant 0 : index
      %c0_27 = arith.constant 0 : index
      %54 = vector.load %arg5[%c0_25, %c0_26, %c0_27] : memref<1x32x32xf32, #tpu.memory_space<vmem>>, vector<1x32x32xf32>
      %55 = vector.shape_cast %54 : vector<1x32x32xf32> to vector<32x32xf32>
      %56 = vector.shape_cast %53 : vector<32x32xf32> to vector<1x32x32xf32>
      tpu.vector_store %arg5[%c0_25, %c0_26, %c0_27], %56 {strides = array<i32>} : memref<1x32x32xf32, #tpu.memory_space<vmem>>, vector<1x32x32xf32>,
      %cst_28 = arith.constant 0.000000e+00 : f32
      %57 = vector.broadcast %cst_28 : f32 to vector<1x32xf32>
      %c0_29 = arith.constant 0 : index
      %c0_30 = arith.constant 0 : index
      %c0_31 = arith.constant 0 : index
      %58 = vector.load %arg6[%c0_29, %c0_30, %c0_31] : memref<1x1x32xf32, #tpu.memory_space<vmem>>, vector<1x1x32xf32>
      %59 = vector.shape_cast %58 : vector<1x1x32xf32> to vector<1x32xf32>
      %60 = vector.shape_cast %57 : vector<1x32xf32> to vector<1x1x32xf32>
      tpu.vector_store %arg6[%c0_29, %c0_30, %c0_31], %60 {strides = array<i32>} : memref<1x1x32xf32, #tpu.memory_space<vmem>>, vector<1x1x32xf32>,
    } else {
    }
    %c0 = arith.constant 0 : index
    %c0_1 = arith.constant 0 : index
    %3 = vector.load %arg2[%c0, %c0_1] : memref<32x32xf32, #tpu.memory_space<vmem>>, vector<32x32xf32>
    %4 = arith.truncf %3 : vector<32x32xf32> to vector<32x32xbf16>
    %c0_2 = arith.constant 0 : index
    %c0_3 = arith.constant 0 : index
    %5 = vector.load %arg3[%c0_2, %c0_3] : memref<32x8xf32, #tpu.memory_space<vmem>>, vector<32x8xf32>
    %c0_4 = arith.constant 0 : index
    %c0_5 = arith.constant 0 : index
    %6 = vector.load %arg4[%c0_4, %c0_5] : memref<32x1xi32, #tpu.memory_space<vmem>>, vector<32x1xi32>
    %c65535_i32 = arith.constant 65535 : i32
    %7 = vector.broadcast %c65535_i32 : i32 to vector<32x1xi32>
    %8 = arith.andi %6, %7 : vector<32x1xi32>
    %c16_i32 = arith.constant 16 : i32
    %9 = vector.broadcast %c16_i32 : i32 to vector<32x1xi32>
    %10 = arith.shrsi %6, %9 : vector<32x1xi32>
    %11 = tpu.iota {dimensions = array<i32: 1>} : vector<32x8xi32>
    %cst = arith.constant dense<0xFF800000> : vector<32xf32>
    %12 = vector.multi_reduction <maximumf>, %5, %cst [1] : vector<32x8xf32> to vector<32xf32>
    %13 = vector.shape_cast %12 : vector<32xf32> to vector<32x1xf32>
    %14 = vector.broadcast %13 : vector<32x1xf32> to vector<32x8xf32>
    %15 = arith.cmpf oeq, %5, %14 : vector<32x8xf32>
    %c8_i32 = arith.constant 8 : i32
    %16 = vector.broadcast %c8_i32 : i32 to vector<32x8xi32>
    %17 = arith.select %15, %11, %16 : vector<32x8xi1>, vector<32x8xi32>
    %cst_6 = arith.constant dense<2147483647> : vector<32xi32>
    %18 = vector.multi_reduction <minsi>, %17, %cst_6 [1] : vector<32x8xi32> to vector<32xi32>
    %19 = vector.shape_cast %18 : vector<32xi32> to vector<32x1xi32>
    %c0_i32_7 = arith.constant 0 : i32
    %20 = vector.broadcast %c0_i32_7 : i32 to vector<32x1xi32>
    %21 = arith.cmpi sgt, %10, %20 : vector<32x1xi32>
    %c4_i32 = arith.constant 4 : i32
    %22 = vector.broadcast %c4_i32 : i32 to vector<32x1xi32>
    %23 = arith.select %21, %8, %22 : vector<32x1xi1>, vector<32x1xi32>
    %24 = tpu.iota {dimensions = array<i32: 1>} : vector<32x32xi32>
    %c4_i32_8 = arith.constant 4 : i32
    %25 = vector.broadcast %c4_i32_8 : i32 to vector<32x1xi32>
    %26 = arith.muli %19, %25 : vector<32x1xi32>
    %27 = arith.addi %26, %23 : vector<32x1xi32>
    %28 = vector.broadcast %27 : vector<32x1xi32> to vector<32x32xi32>
    %29 = arith.cmpi eq, %28, %24 : vector<32x32xi32>
    %c4_i32_9 = arith.constant 4 : i32
    %30 = vector.broadcast %c4_i32_9 : i32 to vector<32x1xi32>
    %31 = arith.cmpi slt, %23, %30 : vector<32x1xi32>
    %32 = vector.broadcast %31 : vector<32x1xi1> to vector<32x32xi1>
    %33 = arith.andi %29, %32 : vector<32x32xi1>
    %34 = arith.extui %33 : vector<32x32xi1> to vector<32x32xi32>
    %35 = arith.sitofp %34 : vector<32x32xi32> to vector<32x32xf32>
    %36 = arith.truncf %35 : vector<32x32xf32> to vector<32x32xbf16>
    %c0_10 = arith.constant 0 : index
    %c0_11 = arith.constant 0 : index
    %c0_12 = arith.constant 0 : index
    %37 = vector.load %arg5[%c0_10, %c0_11, %c0_12] : memref<1x32x32xf32, #tpu.memory_space<vmem>>, vector<1x32x32xf32>
    %38 = vector.shape_cast %37 : vector<1x32x32xf32> to vector<32x32xf32>
    %cst_13 = arith.constant dense<0.000000e+00> : vector<32x32xf32>
    %39 = tpu.matmul %36, %4, %cst_13 {dimension_numbers = #tpu.dot_dimension_numbers<[0], [0], [1], [1], [0, 1, 1, 1], [], []>} : vector<32x32xbf16>, vector<32x32xbf16>, vector<32x32xf32> -> vector<32x32xf32>
    %40 = arith.addf %38, %39 : vector<32x32xf32>
    %c0_14 = arith.constant 0 : index
    %c0_15 = arith.constant 0 : index
    %c0_16 = arith.constant 0 : index
    %41 = vector.load %arg5[%c0_14, %c0_15, %c0_16] : memref<1x32x32xf32, #tpu.memory_space<vmem>>, vector<1x32x32xf32>
    %42 = vector.shape_cast %41 : vector<1x32x32xf32> to vector<32x32xf32>
    %43 = vector.shape_cast %40 : vector<32x32xf32> to vector<1x32x32xf32>
    tpu.vector_store %arg5[%c0_14, %c0_15, %c0_16], %43 {strides = array<i32>} : memref<1x32x32xf32, #tpu.memory_space<vmem>>, vector<1x32x32xf32>,
    %c0_17 = arith.constant 0 : index
    %c0_18 = arith.constant 0 : index
    %c0_19 = arith.constant 0 : index
    %44 = vector.load %arg6[%c0_17, %c0_18, %c0_19] : memref<1x1x32xf32, #tpu.memory_space<vmem>>, vector<1x1x32xf32>
    %45 = vector.shape_cast %44 : vector<1x1x32xf32> to vector<1x32xf32>
    %46 = arith.extf %36 : vector<32x32xbf16> to vector<32x32xf32>
    %cst_20 = arith.constant dense<0.000000e+00> : vector<32xf32>
    %47 = vector.multi_reduction <add>, %46, %cst_20 [0] : vector<32x32xf32> to vector<32xf32>
    %48 = vector.shape_cast %47 : vector<32xf32> to vector<1x32xf32>
    %49 = arith.addf %45, %48 : vector<1x32xf32>
    %c0_21 = arith.constant 0 : index
    %c0_22 = arith.constant 0 : index
    %c0_23 = arith.constant 0 : index
    %50 = vector.load %arg6[%c0_21, %c0_22, %c0_23] : memref<1x1x32xf32, #tpu.memory_space<vmem>>, vector<1x1x32xf32>
    %51 = vector.shape_cast %50 : vector<1x1x32xf32> to vector<1x32xf32>
    %52 = vector.shape_cast %49 : vector<1x32xf32> to vector<1x1x32xf32>
    tpu.vector_store %arg6[%c0_21, %c0_22, %c0_23], %52 {strides = array<i32>} : memref<1x1x32xf32, #tpu.memory_space<vmem>>, vector<1x1x32xf32>,
    return
  }
  func.func @transform_0(%arg0: i32, %arg1: i32) -> (i32, i32) {
    %c3_i32 = arith.constant 3 : i32
    %0 = arith.muli %arg0, %c3_i32 : i32
    %1 = arith.addi %0, %arg1 : i32
    %c0_i32 = arith.constant 0 : i32
    %c0_i32_0 = arith.constant 0 : i32
    return %1, %c0_i32 : i32, i32
  }
  func.func @transform_1(%arg0: i32, %arg1: i32) -> (i32, i32) {
    %c3_i32 = arith.constant 3 : i32
    %0 = arith.muli %arg0, %c3_i32 : i32
    %1 = arith.addi %0, %arg1 : i32
    %c0_i32 = arith.constant 0 : i32
    %c0_i32_0 = arith.constant 0 : i32
    return %1, %c0_i32 : i32, i32
  }
  func.func @transform_2(%arg0: i32, %arg1: i32) -> (i32, i32) {
    %c3_i32 = arith.constant 3 : i32
    %0 = arith.muli %arg0, %c3_i32 : i32
    %1 = arith.addi %0, %arg1 : i32
    %c0_i32 = arith.constant 0 : i32
    %c0_i32_0 = arith.constant 0 : i32
    return %1, %c0_i32 : i32, i32
  }
  func.func @transform_3(%arg0: i32, %arg1: i32) -> (i32, i32, i32) {
    %c0_i32 = arith.constant 0 : i32
    %c0_i32_0 = arith.constant 0 : i32
    %c0_i32_1 = arith.constant 0 : i32
    return %arg0, %c0_i32, %c0_i32_0 : i32, i32, i32
  }
  func.func @transform_4(%arg0: i32, %arg1: i32) -> (i32, i32, i32) {
    %c0_i32 = arith.constant 0 : i32
    %c0_i32_0 = arith.constant 0 : i32
    %c0_i32_1 = arith.constant 0 : i32
    return %arg0, %c0_i32, %c0_i32_0 : i32, i32, i32
  }
}

</mosaic_0001>

<llo_original>
// kernel: tpu_custom_call.1
$region0: #{tpu_custom_call.1}
  #allocation0 [shape = 'u32[]', space=smem, size = 0x4, offset = 0x4, fixed_abs, tag = 'smem constant byte address 0x4 - core index']
  #allocation1 [shape = 'u32[72,128]{1,0:T(1,128)}', space=vmem, size = 0x9000, scoped, tag = 'internal scratch']
  %s0 = inlined_call_operand.vmem [shape: f32[96,32], index: 0, kind: input, shape index: {}]
  %s1 = inlined_call_operand.vmem [shape: f32[96,8], index: 1, kind: input, shape index: {}]
  %s2 = inlined_call_operand.vmem [shape: s32[96,1], index: 2, kind: input, shape index: {}]
  %s3 = inlined_call_operand.hbm [shape: f32[1,32,32], index: 3, kind: output, shape index: {0}]
  %s4 = inlined_call_operand.hbm [shape: f32[1,1,32], index: 4, kind: output, shape index: {1}]
  %5 = xla_tuple %s3, %s4
  %s6 = sld [smem:[#allocation0]]
  $region57: #{tpu_custom_call.1} parent=0
    _
  %s8 = ssub.s32 1, %s6
  %s9 = scalar_select 0, %s8, %s6
  $region1: #{tpu_custom_call.1} parent=0
    #allocation2 [shape = 'u8[16384]{0}', space=vmem, size = 0x4000, scoped, tag = 'output window, operand 0, single buffered']
    #allocation3 [shape = 's32[2]{0}', space=sflag, size = 0x8, scoped, tag = 'scoped memory for tpu_custom_call.1']
    #allocation4 [shape = 'u8[512]{0}', space=vmem, size = 0x400, scoped, tag = 'output window, operand 1, single buffered']
    #allocation5 [shape = 's32[1]{0}', space=sflag, size = 0x4, scoped, tag = 'scoped memory for tpu_custom_call.1']
    %10 = vsyncpa [#allocation3], 0
    %11 = vsyncpa [#allocation5], 0
    loop: start=0, step=1, limit=5
    $region2: #{tpu_custom_call.1} parent=1 // loop_pre_header
      _
    $region3: #{tpu_custom_call.1} parent=1 // loop_header
      %s13 = sphi 0, %s17
      %p14 = scmp.ge.s32.totalorder %s13, 5
      %s20 = sphi 0, %s32
      %s21 = sphi 0, %s28
      %s22 = sphi 0, %s20
      %s23 = sphi 0, %s21
      %s24 = sphi 0, %s22
      %s25 = sphi 0, %s23
      %s39 = sphi 0, %s41
      %s42 = sphi 0, %s39
      %s43 = sphi 0, %s42
      %s59 = sphi 0, %s43
      %s69 = sphi 0, %s71
      %s72 = sphi 0, %s69
      %s73 = sphi 0, %s72
      %s89 = sphi 0, %s73
      %s99 = sphi 0, %s101
      %s102 = sphi 0, %s99
      %s103 = sphi 0, %s102
      %s119 = sphi 0, %s103
      %s125 = sphi 0, %s127
      %s128 = sphi 0, %s125
      %s129 = sphi 0, %s128
      %s145 = sphi 0, %s129
      %s151 = sphi 0, %s153
      %s154 = sphi 0, %s151
      %s155 = sphi 0, %s154
      %s171 = sphi 0, %s155
    $region4: #{tpu_custom_call.1} parent=1 // loop_header_branch
      %16 = sbr.rel (%p14) target = $region8
    $region5: #{tpu_custom_call.1} parent=1 // loop_body
      %s18 = ssub.s32 %s13, 1
      %s19 = ssub.s32 %s13, 2
      %s26 = sadd.s32 1, %s21
      %p27 = scmp.ge.s32.totalorder %s26, 3
      %s28 = scalar_select %p27, 0, %s26
      %s29 = sadd.s32 1, %s20
      %s30 = scalar_select %p27, %s29, %s20
      %p31 = scmp.ge.s32.totalorder %s30, 1
      %s32 = scalar_select %p31, 0, %s30
      %s33 = smul.u32 %s20, 3
      %s34 = sadd.s32 %s33, %s21
      %s35 = smul.u32 %s32, 3
      %s36 = sadd.s32 %s35, %s28
      %s37 = ssub.s32 %s34, %s36
      %p38 = scmp.eq.s32.totalorder %s37, 0
      %s40 = sadd.s32 %s39, 1
      %s41 = scalar_select %p38, %s39, %s40
      %p44 = pneg %p38
      %p45 = scmp.eq.s32.totalorder %s13, 2
      %p46 = por %p44, %p45
      %p47 = scmp.ne.s32.totalorder %s39, %s42
      %p48 = scmp.eq.s32.totalorder %s13, 0
      %p49 = por %p47, %p48
      %p50 = scmp.ne.s32.totalorder %s39, %s42
      %p51 = scmp.eq.s32.totalorder %s18, 2
      %p52 = por %p50, %p51
      %p53 = scmp.ne.s32.totalorder %s42, %s43
      %p54 = scmp.eq.s32.totalorder %s18, 0
      %p55 = por %p53, %p54
      %p56 = scmp.ne.s32.totalorder %s42, %s43
      %p57 = scmp.eq.s32.totalorder %s19, 2
      %p58 = por %p56, %p57
      %p60 = scmp.ne.s32.totalorder %s43, %s59
      %p61 = scmp.eq.s32.totalorder %s19, 0
      %p62 = por %p60, %p61
      %s63 = smul.u32 %s20, 3
      %s64 = sadd.s32 %s63, %s21
      %s65 = smul.u32 %s32, 3
      %s66 = sadd.s32 %s65, %s28
      %s67 = ssub.s32 %s64, %s66
      %p68 = scmp.eq.s32.totalorder %s67, 0
      %s70 = sadd.s32 %s69, 1
      %s71 = scalar_select %p68, %s69, %s70
      %p74 = pneg %p68
      %p75 = scmp.eq.s32.totalorder %s13, 2
      %p76 = por %p74, %p75
      %p77 = scmp.ne.s32.totalorder %s69, %s72
      %p78 = scmp.eq.s32.totalorder %s13, 0
      %p79 = por %p77, %p78
      %p80 = scmp.ne.s32.totalorder %s69, %s72
      %p81 = scmp.eq.s32.totalorder %s18, 2
      %p82 = por %p80, %p81
      %p83 = scmp.ne.s32.totalorder %s72, %s73
      %p84 = scmp.eq.s32.totalorder %s18, 0
      %p85 = por %p83, %p84
      %p86 = scmp.ne.s32.totalorder %s72, %s73
      %p87 = scmp.eq.s32.totalorder %s19, 2
      %p88 = por %p86, %p87
      %p90 = scmp.ne.s32.totalorder %s73, %s89
      %p91 = scmp.eq.s32.totalorder %s19, 0
      %p92 = por %p90, %p91
      %s93 = smul.u32 %s20, 3
      %s94 = sadd.s32 %s93, %s21
      %s95 = smul.u32 %s32, 3
      %s96 = sadd.s32 %s95, %s28
      %s97 = ssub.s32 %s94, %s96
      %p98 = scmp.eq.s32.totalorder %s97, 0
      %s100 = sadd.s32 %s99, 1
      %s101 = scalar_select %p98, %s99, %s100
      %p104 = pneg %p98
      %p105 = scmp.eq.s32.totalorder %s13, 2
      %p106 = por %p104, %p105
      %p107 = scmp.ne.s32.totalorder %s99, %s102
      %p108 = scmp.eq.s32.totalorder %s13, 0
      %p109 = por %p107, %p108
      %p110 = scmp.ne.s32.totalorder %s99, %s102
      %p111 = scmp.eq.s32.totalorder %s18, 2
      %p112 = por %p110, %p111
      %p113 = scmp.ne.s32.totalorder %s102, %s103
      %p114 = scmp.eq.s32.totalorder %s18, 0
      %p115 = por %p113, %p114
      %p116 = scmp.ne.s32.totalorder %s102, %s103
      %p117 = scmp.eq.s32.totalorder %s19, 2
      %p118 = por %p116, %p117
      %p120 = scmp.ne.s32.totalorder %s103, %s119
      %p121 = scmp.eq.s32.totalorder %s19, 0
      %p122 = por %p120, %p121
      %s123 = ssub.s32 %s20, %s32
      %p124 = scmp.eq.s32.totalorder %s123, 0
      %s126 = sadd.s32 %s125, 1
      %s127 = scalar_select %p124, %s125, %s126
      %p130 = pneg %p124
      %p131 = scmp.eq.s32.totalorder %s13, 2
      %p132 = por %p130, %p131
      %p133 = scmp.ne.s32.totalorder %s125, %s128
      %p134 = scmp.eq.s32.totalorder %s13, 0
      %p135 = por %p133, %p134
      %p136 = scmp.ne.s32.totalorder %s125, %s128
      %p137 = scmp.eq.s32.totalorder %s18, 2
      %p138 = por %p136, %p137
      %p139 = scmp.ne.s32.totalorder %s128, %s129
      %p140 = scmp.eq.s32.totalorder %s18, 0
      %p141 = por %p139, %p140
      %p142 = scmp.ne.s32.totalorder %s128, %s129
      %p143 = scmp.eq.s32.totalorder %s19, 2
      %p144 = por %p142, %p143
      %p146 = scmp.ne.s32.totalorder %s129, %s145
      %p147 = scmp.eq.s32.totalorder %s19, 0
      %p148 = por %p146, %p147
      %s149 = ssub.s32 %s20, %s32
      %p150 = scmp.eq.s32.totalorder %s149, 0
      %s152 = sadd.s32 %s151, 1
      %s153 = scalar_select %p150, %s151, %s152
      %p156 = pneg %p150
      %p157 = scmp.eq.s32.totalorder %s13, 2
      %p158 = por %p156, %p157
      %p159 = scmp.ne.s32.totalorder %s151, %s154
      %p160 = scmp.eq.s32.totalorder %s13, 0
      %p161 = por %p159, %p160
      %p162 = scmp.ne.s32.totalorder %s151, %s154
      %p163 = scmp.eq.s32.totalorder %s18, 2
      %p164 = por %p162, %p163
      %p165 = scmp.ne.s32.totalorder %s154, %s155
      %p166 = scmp.eq.s32.totalorder %s18, 0
      %p167 = por %p165, %p166
      %p168 = scmp.ne.s32.totalorder %s154, %s155
      %p169 = scmp.eq.s32.totalorder %s19, 2
      %p170 = por %p168, %p169
      %p172 = scmp.ne.s32.totalorder %s155, %s171
      %p173 = scmp.eq.s32.totalorder %s19, 0
      %p174 = por %p172, %p173
      %p175 = scmp.le.s32.totalorder 1, %s13
      %p176 = scmp.lt.s32.totalorder %s13, 4
      %p177 = pnand %p175, %p176
      %p178 = pneg %p177
      // Predicated region
      $region9: #{tpu_custom_call.1} parent=5 // pred_check
        _
      $region10: #{tpu_custom_call.1} parent=5 // pred_check_branch
        %180 = sbr.rel (%p177) target = $region12
      $region11: #{tpu_custom_call.1} parent=5 // pred_region
        %s181 = ssub.s32 %s13, 1
      $region12: #{tpu_custom_call.1} parent=5 // pred_fallthru
        _
      %p182 = scmp.lt.s32.totalorder %s13, 3
      // Predicated region
      $region13: #{tpu_custom_call.1} parent=5 // pred_check
        %p183 = pneg %p182
      $region14: #{tpu_custom_call.1} parent=5 // pred_check_branch
        %185 = sbr.rel (%p183) target = $region16
      $region15: #{tpu_custom_call.1} parent=5 // pred_region
        // Predicated region
        $region17: #{tpu_custom_call.1} parent=15 // pred_check
          %p186 = pneg %p49
        $region18: #{tpu_custom_call.1} parent=15 // pred_check_branch
          %188 = sbr.rel (%p186) target = $region20
        $region19: #{tpu_custom_call.1} parent=15 // pred_region
          %s189 = smul.u32 %s20, 3
          %s190 = sadd.s32 %s189, %s21
          %s191 = smul.u32 4, %s190
          %p192 = scmp.lt.s32.totalorder %s191, 11
          %s193 = scalar_select %p192, %s191, 11
          %s194 = smul.addr %s193, 8
          %s195 = scalar_lea.vmem %s0, %s194
          %s196 = smul.u32 %s20, 3
          %s197 = sadd.s32 %s196, %s21
          %s198 = smul.u32 4, %s197
        $region20: #{tpu_custom_call.1} parent=15 // pred_fallthru
          _
        // Predicated region
        $region21: #{tpu_custom_call.1} parent=15 // pred_check
          %p199 = pneg %p79
        $region22: #{tpu_custom_call.1} parent=15 // pred_check_branch
          %201 = sbr.rel (%p199) target = $region24
        $region23: #{tpu_custom_call.1} parent=15 // pred_region
          %s202 = smul.u32 %s20, 3
          %s203 = sadd.s32 %s202, %s21
          %s204 = smul.u32 4, %s203
          %p205 = scmp.lt.s32.totalorder %s204, 11
          %s206 = scalar_select %p205, %s204, 11
          %s207 = smul.addr %s206, 8
          %s208 = scalar_lea.vmem %s1, %s207
          %s209 = smul.u32 %s20, 3
          %s210 = sadd.s32 %s209, %s21
          %s211 = smul.u32 4, %s210
        $region24: #{tpu_custom_call.1} parent=15 // pred_fallthru
          _
        // Predicated region
        $region25: #{tpu_custom_call.1} parent=15 // pred_check
          %p212 = pneg %p109
        $region26: #{tpu_custom_call.1} parent=15 // pred_check_branch
          %214 = sbr.rel (%p212) target = $region28
        $region27: #{tpu_custom_call.1} parent=15 // pred_region
          %s215 = smul.u32 %s20, 3
          %s216 = sadd.s32 %s215, %s21
          %s217 = smul.u32 4, %s216
          %p218 = scmp.lt.s32.totalorder %s217, 11
          %s219 = scalar_select %p218, %s217, 11
          %s220 = smul.addr %s219, 8
          %s221 = scalar_lea.vmem %s2, %s220
          %s222 = smul.u32 %s20, 3
          %s223 = sadd.s32 %s222, %s21
          %s224 = smul.u32 4, %s223
        $region28: #{tpu_custom_call.1} parent=15 // pred_fallthru
          _
      $region16: #{tpu_custom_call.1} parent=5 // pred_fallthru
        _
      %p225 = scmp.le.s32.totalorder 1, %s13
      %p226 = scmp.lt.s32.totalorder %s13, 4
      %p227 = pnand %p225, %p226
      %p228 = pneg %p227
      // Predicated region
      $region29: #{tpu_custom_call.1} parent=5 // pred_check
        _
      $region30: #{tpu_custom_call.1} parent=5 // pred_check_branch
        %230 = sbr.rel (%p227) target = $region32
      $region31: #{tpu_custom_call.1} parent=5 // pred_region
        %s231 = ssub.s32 %s13, 1
        %s232 = smul.u32 %s22, 3
        %s233 = sadd.s32 %s232, %s23
        %s234 = smul.u32 4, %s233
        %p235 = scmp.lt.s32.totalorder %s234, 11
        %s236 = scalar_select %p235, %s234, 11
        %s237 = smul.addr %s236, 8
        %s238 = scalar_lea.vmem %s0, %s237
        %p239 = pneg %p55
        %p240 = pneg %p52
        %s241 = smul.u32 %s22, 3
        %s242 = sadd.s32 %s241, %s23
        %s243 = smul.u32 4, %s242
        %p244 = scmp.lt.s32.totalorder %s243, 11
        %s245 = scalar_select %p244, %s243, 11
        %s246 = smul.addr %s245, 8
        %s247 = scalar_lea.vmem %s1, %s246
        %p248 = pneg %p85
        %p249 = pneg %p82
        %s250 = smul.u32 %s22, 3
        %s251 = sadd.s32 %s250, %s23
        %s252 = smul.u32 4, %s251
        %p253 = scmp.lt.s32.totalorder %s252, 11
        %s254 = scalar_select %p253, %s252, 11
        %s255 = smul.addr %s254, 8
        %s256 = scalar_lea.vmem %s2, %s255
        %p257 = pneg %p115
        %p258 = pneg %p112
        %p259 = pneg %p141
        %p260 = pneg %p138
        %p261 = pneg %p167
        %p262 = pneg %p164
        %s263 = smul.u32 %s22, 3
        %s264 = sadd.s32 %s263, %s23
        %s265 = smul.u32 4, %s264
        %p266 = scmp.lt.s32.totalorder %s265, 11
        %s267 = scalar_select %p266, %s265, 11
        %s268 = smul.addr %s267, 8
        %s269 = scalar_lea.vmem %s0, %s268
        %s270 = smul.u32 %s22, 3
        %s271 = sadd.s32 %s270, %s23
        %s272 = smul.u32 4, %s271
        %s273 = smul.u32 %s22, 3
        %s274 = sadd.s32 %s273, %s23
        %s275 = smul.u32 4, %s274
        %p276 = scmp.lt.s32.totalorder %s275, 11
        %s277 = scalar_select %p276, %s275, 11
        %s278 = smul.addr %s277, 8
        %s279 = scalar_lea.vmem %s1, %s278
        %s280 = smul.u32 %s22, 3
        %s281 = sadd.s32 %s280, %s23
        %s282 = smul.u32 4, %s281
        %s283 = smul.u32 %s22, 3
        %s284 = sadd.s32 %s283, %s23
        %s285 = smul.u32 4, %s284
        %p286 = scmp.lt.s32.totalorder %s285, 11
        %s287 = scalar_select %p286, %s285, 11
        %s288 = smul.addr %s287, 8
        %s289 = scalar_lea.vmem %s2, %s288
        %s290 = smul.u32 %s22, 3
        %s291 = sadd.s32 %s290, %s23
        %s292 = smul.u32 4, %s291
        %p294 = scmp.eq.s32.totalorder %s23, 0
        // Predicated region
        $region33: #{tpu_custom_call.1} parent=31 // pred_check
          %p295 = pneg %p294
        $region34: #{tpu_custom_call.1} parent=31 // pred_check_branch
          %297 = sbr.rel (%p295) target = $region36
        $region35: #{tpu_custom_call.1} parent=31 // pred_region
          %vm298 = vcmask 261120
          %299 = vst.msk [vmem:[#allocation2] sm:$0xff] %vm298, 0.0
          %300 = vst.msk [vmem:[#allocation2 + $0x8] sm:$0xff] %vm298, 0.0
          %301 = vst.msk [vmem:[#allocation2 + $0x10] sm:$0xff] %vm298, 0.0
          %302 = vst.msk [vmem:[#allocation2 + $0x18] sm:$0xff] %vm298, 0.0
          %vm303 = vcmask 253952
          %304 = vst.msk [vmem:[#allocation4] sm:$0x1] %vm303, 0.0
        $region36: #{tpu_custom_call.1} parent=31 // pred_fallthru
          _
        %v305 = vld [vmem:[%s269] sm:$0xff]
        %v306 = vld [vmem:[%s269 + $0x8] sm:$0xff]
        %v307 = vld [vmem:[%s269 + $0x10] sm:$0xff]
        %v308 = vld [vmem:[%s269 + $0x18] sm:$0xff]
        %v309 = vpack.c.bf16 %v306, %v305
        %v310 = vpack.c.bf16 %v308, %v307
        %v311 = vld [vmem:[%s279] sm:$0xff]
        %v312 = vld [vmem:[%s279 + $0x8] sm:$0xff]
        %v313 = vld [vmem:[%s279 + $0x10] sm:$0xff]
        %v314 = vld [vmem:[%s279 + $0x18] sm:$0xff]
        %v315 = vld [vmem:[%s289] sm:$0xff]
        %v316 = vld [vmem:[%s289 + $0x8] sm:$0xff]
        %v317 = vld [vmem:[%s289 + $0x10] sm:$0xff]
        %v318 = vld [vmem:[%s289 + $0x18] sm:$0xff]
        %v319 = vand.u32 %v315, 65535
        %v320 = vand.u32 %v316, 65535
        %v321 = vand.u32 %v317, 65535
        %v322 = vand.u32 %v318, 65535
        %v323 = vshra.s32 %v315, 16
        %v324 = vshra.s32 %v316, 16
        %v325 = vshra.s32 %v317, 16
        %v326 = vshra.s32 %v318, 16
        %v327 = vlaneseq
        %v328 = vand.u32 %v327, 127
        %vm329 = vcmask 64512
        %v330 = vsel %vm329, %v311, -inf
        %331 = vmax.xlane.f32.xlu0 %v330
        %v332 = vpop.xlane.xlu0 %331
        %v333 = vsel %vm329, %v312, -inf
        %334 = vmax.xlane.f32.xlu0 %v333
        %v335 = vpop.xlane.xlu0 %334
        %v336 = vsel %vm329, %v313, -inf
        %337 = vmax.xlane.f32.xlu0 %v336
        %v338 = vpop.xlane.xlu0 %337
        %v339 = vsel %vm329, %v314, -inf
        %340 = vmax.xlane.f32.xlu0 %v339
        %v341 = vpop.xlane.xlu0 %340
        %vm342 = vcmp.eq.f32.partialorder %v311, %v332
        %vm343 = vcmp.eq.f32.partialorder %v312, %v335
        %vm344 = vcmp.eq.f32.partialorder %v313, %v338
        %vm345 = vcmp.eq.f32.partialorder %v314, %v341
        %v346 = vsel %vm342, %v328, 8
        %v347 = vsel %vm343, %v328, 8
        %v348 = vsel %vm344, %v328, 8
        %v349 = vsel %vm345, %v328, 8
        %v350 = vsel %vm329, %v346, 2147483647
        %v351 = vand.u32 %v350, 65535
        %v352 = vshra.s32 %v350, 16
        %v353 = vcvt.s32.f32 %v351
        %v354 = vcvt.s32.f32 %v352
        %355 = vmin.xlane.f32.xlu0 %v354
        %v356 = vpop.xlane.xlu0 %355
        %vm357 = vcmp.eq.f32.partialorder %v354, %v356
        %v358 = vsel %vm357, %v353, inf
        %359 = vmin.xlane.f32.xlu0 %v358
        %v360 = vpop.xlane.xlu0 %359
        %v361 = vcvt.f32.s32 %v360
        %v362 = vcvt.f32.s32 %v356
        %v363 = vshll.u32 %v362, 16
        %v364 = vadd.s32 %v363, %v361
        %v365 = vsel %vm329, %v347, 2147483647
        %v366 = vand.u32 %v365, 65535
        %v367 = vshra.s32 %v365, 16
        %v368 = vcvt.s32.f32 %v366
        %v369 = vcvt.s32.f32 %v367
        %370 = vmin.xlane.f32.xlu0 %v369
        %v371 = vpop.xlane.xlu0 %370
        %vm372 = vcmp.eq.f32.partialorder %v369, %v371
        %v373 = vsel %vm372, %v368, inf
        %374 = vmin.xlane.f32.xlu0 %v373
        %v375 = vpop.xlane.xlu0 %374
        %v376 = vcvt.f32.s32 %v375
        %v377 = vcvt.f32.s32 %v371
        %v378 = vshll.u32 %v377, 16
        %v379 = vadd.s32 %v378, %v376
        %v380 = vsel %vm329, %v348, 2147483647
        %v381 = vand.u32 %v380, 65535
        %v382 = vshra.s32 %v380, 16
        %v383 = vcvt.s32.f32 %v381
        %v384 = vcvt.s32.f32 %v382
        %385 = vmin.xlane.f32.xlu0 %v384
        %v386 = vpop.xlane.xlu0 %385
        %vm387 = vcmp.eq.f32.partialorder %v384, %v386
        %v388 = vsel %vm387, %v383, inf
        %389 = vmin.xlane.f32.xlu0 %v388
        %v390 = vpop.xlane.xlu0 %389
        %v391 = vcvt.f32.s32 %v390
        %v392 = vcvt.f32.s32 %v386
        %v393 = vshll.u32 %v392, 16
        %v394 = vadd.s32 %v393, %v391
        %v395 = vsel %vm329, %v349, 2147483647
        %v396 = vand.u32 %v395, 65535
        %v397 = vshra.s32 %v395, 16
        %v398 = vcvt.s32.f32 %v396
        %v399 = vcvt.s32.f32 %v397
        %400 = vmin.xlane.f32.xlu0 %v399
        %v401 = vpop.xlane.xlu0 %400
        %vm402 = vcmp.eq.f32.partialorder %v399, %v401
        %v403 = vsel %vm402, %v398, inf
        %404 = vmin.xlane.f32.xlu0 %v403
        %v405 = vpop.xlane.xlu0 %404
        %v406 = vcvt.f32.s32 %v405
        %v407 = vcvt.f32.s32 %v401
        %v408 = vshll.u32 %v407, 16
        %v409 = vadd.s32 %v408, %v406
        %vm410 = vcmp.gt.s32.totalorder %v323, 0
        %vm411 = vcmp.gt.s32.totalorder %v324, 0
        %vm412 = vcmp.gt.s32.totalorder %v325, 0
        %vm413 = vcmp.gt.s32.totalorder %v326, 0
        %v414 = vsel %vm410, %v319, 4
        %v415 = vsel %vm411, %v320, 4
        %v416 = vsel %vm412, %v321, 4
        %v417 = vsel %vm413, %v322, 4
        %v418 = vmul.u32 %v364, 4
        %v419 = vmul.u32 %v379, 4
        %v420 = vmul.u32 %v394, 4
        %v421 = vmul.u32 %v409, 4
        %v422 = vadd.s32 %v418, %v414
        %v423 = vadd.s32 %v419, %v415
        %v424 = vadd.s32 %v420, %v416
        %v425 = vadd.s32 %v421, %v417
        %426 = vset.pattern.permute.xlu0 0
        %427 = vperm.xlu0 %426, %v422
        %v428 = vpop.permute.xlu0 %427
        %429 = vset.pattern.permute.xlu0 0
        %430 = vperm.xlu0 %429, %v423
        %v431 = vpop.permute.xlu0 %430
        %432 = vset.pattern.permute.xlu0 0
        %433 = vperm.xlu0 %432, %v424
        %v434 = vpop.permute.xlu0 %433
        %435 = vset.pattern.permute.xlu0 0
        %436 = vperm.xlu0 %435, %v425
        %v437 = vpop.permute.xlu0 %436
        %vm438 = vcmp.eq.s32.totalorder %v428, %v328
        %vm439 = vcmp.eq.s32.totalorder %v431, %v328
        %vm440 = vcmp.eq.s32.totalorder %v434, %v328
        %vm441 = vcmp.eq.s32.totalorder %v437, %v328
        %vm442 = vcmp.lt.s32.totalorder %v414, 4
        %vm443 = vcmp.lt.s32.totalorder %v415, 4
        %vm444 = vcmp.lt.s32.totalorder %v416, 4
        %vm445 = vcmp.lt.s32.totalorder %v417, 4
        %v446 = vsel %vm442, 1, 0
        %v447 = vsel %vm443, 1, 0
        %v448 = vsel %vm444, 1, 0
        %v449 = vsel %vm445, 1, 0
        %450 = vset.pattern.permute.xlu0 0
        %451 = vperm.xlu0 %450, %v446
        %v452 = vpop.permute.xlu0 %451
        %453 = vset.pattern.permute.xlu0 0
        %454 = vperm.xlu0 %453, %v447
        %v455 = vpop.permute.xlu0 %454
        %456 = vset.pattern.permute.xlu0 0
        %457 = vperm.xlu0 %456, %v448
        %v458 = vpop.permute.xlu0 %457
        %459 = vset.pattern.permute.xlu0 0
        %460 = vperm.xlu0 %459, %v449
        %v461 = vpop.permute.xlu0 %460
        %vm462 = vcmp.eq.s32.totalorder %v452, 1
        %vm463 = vcmp.eq.s32.totalorder %v455, 1
        %vm464 = vcmp.eq.s32.totalorder %v458, 1
        %vm465 = vcmp.eq.s32.totalorder %v461, 1
        %vm466 = vmand %vm438, %vm462
        %vm467 = vmand %vm439, %vm463
        %vm468 = vmand %vm440, %vm464
        %vm469 = vmand %vm441, %vm465
        %v470 = vsel %vm466, 1, 0
        %v471 = vsel %vm467, 1, 0
        %v472 = vsel %vm468, 1, 0
        %v473 = vsel %vm469, 1, 0
        %v474 = vcvt.s32.f32 %v470
        %v475 = vcvt.s32.f32 %v471
        %v476 = vcvt.s32.f32 %v472
        %v477 = vcvt.s32.f32 %v473
        %v478 = vpack.c.bf16 %v475, %v474
        %v479 = vpack.c.bf16 %v477, %v476
        %v480 = vld [vmem:[#allocation2] sm:$0xff]
        %v481 = vld [vmem:[#allocation2 + $0x8] sm:$0xff]
        %v482 = vld [vmem:[#allocation2 + $0x10] sm:$0xff]
        %v483 = vld [vmem:[#allocation2 + $0x18] sm:$0xff]
        %484 = vxpose.xlu0.c.b16.start [1/8] %v478, 128
        %485 = vxpose.xlu0.c.b16.cont [2/8] %v479, 128
        %486 = vxpose.xlu0.c.b16.cont [3/8] 0, 128
        %487 = vxpose.xlu0.c.b16.cont [4/8] 0, 128
        %488 = vxpose.xlu0.c.b16.cont [5/8] 0, 128
        %489 = vxpose.xlu0.c.b16.cont [6/8] 0, 128
        %490 = vxpose.xlu0.c.b16.cont [7/8] 0, 128
        %491 = vxpose.xlu0.c.b16.end [8/8] 0, 128
        %v492 = vpop.trf.xlu0
        %v493 = vpop.trf.xlu0
        %v494 = vpop.trf.xlu0
        %v495 = vpop.trf.xlu0
        %v496 = vpop.trf.xlu0
        %v497 = vpop.trf.xlu0
        %v498 = vpop.trf.xlu0
        %v499 = vpop.trf.xlu0
        %vm500 = vcmask 261120
        %v502 = vsel %vm500, %v492, 0
        %v505 = vsel %vm500, %v493, 0
        %507 = vmatpush.bf16.msra.mxu0 0
        %508 = vmatpush.bf16.msra.mxu0 0
        %509 = vmatpush.bf16.msra.mxu0 0
        %510 = vmatpush.bf16.msra.mxu0 0
        %511 = vmatpush.bf16.msra.mxu0 0
        %512 = vmatpush.bf16.msra.mxu0 0
        %513 = vmatpush.bf16.msra.mxu0 %v310
        %514 = vmatpush.bf16.msra.mxu0 %v309
        %515 = vmatmul.bf16.gmra.mxu0 %v502
        %v516 = vpop.f32.mrf.mxu0
        %v517 = vadd.f32 0.0, %v516
        %v518 = vpop.f32.mrf.mxu0
        %v519 = vadd.f32 0.0, %v518
        %520 = vmatmul.bf16.gmra.mxu0 %v505
        %v521 = vpop.f32.mrf.mxu0
        %v522 = vadd.f32 0.0, %v521
        %v523 = vpop.f32.mrf.mxu0
        %v524 = vadd.f32 0.0, %v523
        %525 = vdwg.mxu0
        %v526 = vadd.f32 %v480, %v517
        %v527 = vadd.f32 %v481, %v519
        %v528 = vadd.f32 %v482, %v522
        %v529 = vadd.f32 %v483, %v524
        %530 = vst.msk [vmem:[#allocation2] sm:$0xff] %vm500, %v526
        %531 = vst.msk [vmem:[#allocation2 + $0x8] sm:$0xff] %vm500, %v527
        %532 = vst.msk [vmem:[#allocation2 + $0x10] sm:$0xff] %vm500, %v528
        %533 = vst.msk [vmem:[#allocation2 + $0x18] sm:$0xff] %vm500, %v529
        %v534 = vld [vmem:[#allocation4] sm:$0x1]
        %v535 = vunpack.c.l.bf16 %v478
        %v536 = vunpack.c.h.bf16 %v478
        %v537 = vunpack.c.l.bf16 %v479
        %v538 = vunpack.c.h.bf16 %v479
        %v539 = vsel %vm500, %v535, 0.0
        %v540 = vsel %vm500, %v536, 0.0
        %v541 = vadd.f32 %v539, %v540
        %v542 = vsel %vm500, %v537, 0.0
        %v543 = vadd.f32 %v541, %v542
        %v544 = vsel %vm500, %v538, 0.0
        %v545 = vadd.f32 %v543, %v544
        %v546 = vrot.slane %v545, 4
        %v547 = vadd.f32 %v545, %v546
        %v548 = vrot.slane %v547, 2
        %v549 = vadd.f32 %v547, %v548
        %v550 = vrot.slane %v549, 1
        %v551 = vadd.f32 %v549, %v550
        %v552 = vadd.f32 %v534, %v551
        %vm553 = vcmask 253952
        %554 = vst.msk [vmem:[#allocation4] sm:$0x1] %vm553, %v552
        // Predicated region
        $region37: #{tpu_custom_call.1} parent=31 // pred_check
          %p555 = pneg %p138
        $region38: #{tpu_custom_call.1} parent=31 // pred_check_branch
          %557 = sbr.rel (%p555) target = $region40
        $region39: #{tpu_custom_call.1} parent=31 // pred_region
          %559 = vsyncadd [#allocation3], 0
          %s560 = smul.addr %s22, 4
          %s561 = smul.addr %s560, 8
          %s562 = scalar_lea.hbm %s3, %s561
          %s563 = sshll.u32 [#allocation2], 4
          %s564 = int_to_ptr.vmem [resolvable:$true] %s563
          %s565 = sshll.u32 %s562, 4
          %s566 = int_to_ptr.hbm [resolvable:$true] %s565
          %571 = dma.vmem_to_hbm [thread:$0]  %s564, 512, %s566, [#allocation3], 128, 128, 8
        $region40: #{tpu_custom_call.1} parent=31 // pred_fallthru
          _
        // Predicated region
        $region41: #{tpu_custom_call.1} parent=31 // pred_check
          %p572 = pneg %p164
        $region42: #{tpu_custom_call.1} parent=31 // pred_check_branch
          %574 = sbr.rel (%p572) target = $region44
        $region43: #{tpu_custom_call.1} parent=31 // pred_region
          %576 = vsyncadd [#allocation5], 0
          %s577 = scalar_lea.hbm %s4, %s22
          %s579 = sshll.u32 [#allocation4], 4
          %s580 = int_to_ptr.vmem [resolvable:$true] %s579
          %s581 = sshll.u32 %s577, 4
          %s582 = int_to_ptr.hbm [resolvable:$true] %s581
          %584 = dma.vmem_to_hbm [thread:$0]  %s580, 16, %s582, [#allocation5]
        $region44: #{tpu_custom_call.1} parent=31 // pred_fallthru
          _
        // Predicated region
        $region45: #{tpu_custom_call.1} parent=31 // pred_check
          %p585 = pneg %p138
        $region46: #{tpu_custom_call.1} parent=31 // pred_check_branch
          %587 = sbr.rel (%p585) target = $region48
        $region47: #{tpu_custom_call.1} parent=31 // pred_region
          %589 = dma.done [#allocation3], 512
        $region48: #{tpu_custom_call.1} parent=31 // pred_fallthru
          _
        // Predicated region
        $region49: #{tpu_custom_call.1} parent=31 // pred_check
          %p590 = pneg %p164
        $region50: #{tpu_custom_call.1} parent=31 // pred_check_branch
          %592 = sbr.rel (%p590) target = $region52
        $region51: #{tpu_custom_call.1} parent=31 // pred_region
          %594 = dma.done [#allocation5], 16
        $region52: #{tpu_custom_call.1} parent=31 // pred_fallthru
          _
      $region32: #{tpu_custom_call.1} parent=5 // pred_fallthru
        _
      %p595 = scmp.le.s32.totalorder 2, %s13
      // Predicated region
      $region53: #{tpu_custom_call.1} parent=5 // pred_check
        %p596 = pneg %p595
      $region54: #{tpu_custom_call.1} parent=5 // pred_check_branch
        %598 = sbr.rel (%p596) target = $region56
      $region55: #{tpu_custom_call.1} parent=5 // pred_region
        %s599 = ssub.s32 %s13, 2
      $region56: #{tpu_custom_call.1} parent=5 // pred_fallthru
        _
    $region6: #{tpu_custom_call.1} parent=1 // loop_footer
      %s17 = sadd.s32 1, %s13
    $region7: #{tpu_custom_call.1} parent=1 // loop_footer_branch
      %12 = sbr.rel target = $region3
    $region8: #{tpu_custom_call.1} parent=1 // loop_exit
      _
    %600 = vsyncpa [#allocation3], 1
    %s601 = scalar_lea.sflag [#allocation3], 1
    %602 = vsyncpa %s601, 1
    %603 = vsyncpa [#allocation5], 1

</llo_original>
